<compile_context>
chip_gen: v7x
topology: tpu7x:2x2x1
jax: 0.10.0
libtpu: 0.0.40
codegen_flags: <defaults>
</compile_context>

<pallas_src>
import jax
import jax.numpy as jnp
from jax.experimental import pallas as pl
from jax.experimental.pallas import tpu as pltpu


def _round_up(x, m):
    return ((x + m - 1) // m) * m


def _vmem_limit_bytes(estimate, headroom=4 << 20):
    # Explicit scoped-VMEM budget: at least 32 MiB, never above 56 MiB (v7x has 64 MiB
    # physical per TensorCore; v5e/v6e have 128 MiB so this is always safe).
    return int(min(max(estimate + headroom, 32 << 20), 56 << 20))


# ---------------------------------------------------------------------------
# Pass 1: per-tile raw logits + online log-sum-exp over the tiled vocab axis.
# ---------------------------------------------------------------------------
def _logits_lse_kernel(x_ref, w_ref, b_ref, logits_ref, lse_ref, m_sc, l_sc):
    # x_ref:      (tm, d_model) f32      w_ref: (d_model, tn) bf16
    # b_ref:      (1, tn) f32
    # logits_ref: (tm, tn) f32  (written every step, lane-dense)
    # lse_ref:    (tm, 1) f32   (resident across the vocab axis, written at the end)
    # m_sc/l_sc:  (tm, 1) f32 scratch (running max / running sum-of-exp)
    j = pl.program_id(1)
    nj = pl.num_programs(1)

    @pl.when(j == 0)
    def _():
        m_sc[...] = jnp.full_like(m_sc, -jnp.inf)
        l_sc[...] = jnp.zeros_like(l_sc)

    # bf16 cast happens in-kernel (VPU); MXU matmul with f32 accumulation.
    x = x_ref[...].astype(jnp.bfloat16)
    logits = jnp.dot(x, w_ref[...], preferred_element_type=jnp.float32) + b_ref[...]

    # Raw logits for this (i, j) tile go straight to HBM -- no full-vocab residency.
    logits_ref[...] = logits

    # Online max / sum-of-exp update over the vocab axis.
    m_prev = m_sc[...]
    m_new = jnp.maximum(m_prev, jnp.max(logits, axis=-1, keepdims=True))
    l_sc[...] = l_sc[...] * jnp.exp(m_prev - m_new) + jnp.sum(
        jnp.exp(logits - m_new), axis=-1, keepdims=True)
    m_sc[...] = m_new

    @pl.when(j == nj - 1)
    def _():
        lse_ref[...] = m_sc[...] + jnp.log(l_sc[...])


# ---------------------------------------------------------------------------
# Pass 2: trivial elementwise normalize (log_softmax = logits - LSE).
# ---------------------------------------------------------------------------
def _normalize_kernel(logits_ref, lse_ref, o_ref):
    o_ref[...] = (logits_ref[...] - lse_ref[...]).astype(o_ref.dtype)


def prepare_generator_params(weight, bias, *, tn=512):
    """One-time parameter prep for nn.Linear(d_model, vocab).

    weight: (vocab, d_model), bias: (vocab,).
    Transposes to (d_model, vocab_pad) bf16 and pads the vocab axis to a multiple of tn
    (zero weight columns, bias = -1e30 so padded lanes never affect the softmax).
    Returns (w_t, b2d, vocab)."""
    weight = jnp.asarray(weight)
    bias = jnp.asarray(bias)
    vocab, _ = weight.shape

    tn = max(128, min(_round_up(tn, 128), _round_up(vocab, 128)))
    vocab_pad = _round_up(vocab, tn)

    w_t = weight.T.astype(jnp.bfloat16)                      # (d_model, vocab)
    b = bias.astype(jnp.float32)
    if vocab_pad != vocab:
        w_t = jnp.pad(w_t, ((0, 0), (0, vocab_pad - vocab)))
        b = jnp.pad(b, (0, vocab_pad - vocab), constant_values=-1e30)
    return w_t, b.reshape(1, -1), vocab


def generator_forward(x, w_t, b2d, vocab, *, tm=256, tn=512,
                      out_dtype=jnp.float32, weight_buffers=2):
    """x: (batch, seq, d_model) f32; w_t: (d_model, vocab_pad) bf16; b2d: (1, vocab_pad) f32."""
    batch, seq, d_model = x.shape
    vocab_pad = w_t.shape[1]

    # --- vocab tile: multiple of 128 that divides the padded vocab --------------------
    if vocab_pad % 128 != 0:
        tn = vocab_pad                                      # defensive fallback
    else:
        tn = max(128, min(_round_up(tn, 128), vocab_pad))
        while vocab_pad % tn != 0:
            tn -= 128

    # --- row tile: big (amortize weight streaming), balanced, >= 2 tiles for v7x -------
    M = batch * seq
    tm = max(8, min(tm, _round_up(M, 8)))
    n_row_tiles = pl.cdiv(M, tm)
    if n_row_tiles < 2 and M > 8:
        n_row_tiles = 2                                     # keep both v7x TCs busy
    tm = max(8, _round_up(pl.cdiv(M, n_row_tiles), 8))
    m_pad = _round_up(M, tm)

    x2d = x.reshape(M, d_model)                             # f32; cast happens in-kernel
    if m_pad != M:
        x2d = jnp.pad(x2d, ((0, m_pad - M), (0, 0)))

    grid1 = (m_pad // tm, vocab_pad // tn)

    wbuf = max(2, int(weight_buffers))
    if wbuf > 2:
        w_spec = pl.BlockSpec((d_model, tn), lambda i, j: (0, j),
                              pipeline_mode=pl.Buffered(wbuf))
    else:
        w_spec = pl.BlockSpec((d_model, tn), lambda i, j: (0, j))

    est1 = (2 * tm * d_model * 4          # x tiles (f32, double-buffered)
            + wbuf * d_model * tn * 2     # weight tiles (bf16)
            + 2 * 8 * tn * 4              # bias tiles (sublane-padded)
            + 2 * tm * tn * 4             # raw-logit output tiles
            + 4 * tm * 128 * 4)           # lse output + scratch (lane-padded)

    logits, lse = pl.pallas_call(
        _logits_lse_kernel,
        out_shape=(jax.ShapeDtypeStruct((m_pad, vocab_pad), jnp.float32),
                   jax.ShapeDtypeStruct((m_pad, 1), jnp.float32)),
        grid_spec=pltpu.PrefetchScalarGridSpec(
            num_scalar_prefetch=0,
            grid=grid1,
            in_specs=[
                pl.BlockSpec((tm, d_model), lambda i, j: (i, 0)),   # activations
                w_spec,                                             # weight tile
                pl.BlockSpec((1, tn), lambda i, j: (0, j)),         # bias tile
            ],
            out_specs=[
                pl.BlockSpec((tm, tn), lambda i, j: (i, j)),        # raw logits per tile
                pl.BlockSpec((tm, 1), lambda i, j: (i, 0)),         # LSE (resident over j)
            ],
            scratch_shapes=[
                pltpu.VMEM((tm, 1), jnp.float32),   # running max
                pltpu.VMEM((tm, 1), jnp.float32),   # running sum of exp
            ],
        ),
        compiler_params=pltpu.CompilerParams(
            dimension_semantics=("parallel", "arbitrary"),
            vmem_limit_bytes=_vmem_limit_bytes(est1),
        ),
    )(x2d, w_t, b2d)

    # --- pass 2: lane-dense elementwise normalize (logits - LSE) ----------------------
    tn2 = tn
    while tn2 * 2 <= 2048 and vocab_pad % (tn2 * 2) == 0:
        tn2 *= 2
    grid2 = (m_pad // tm, vocab_pad // tn2)

    itemsize = jnp.dtype(out_dtype).itemsize
    est2 = 2 * tm * tn2 * 4 + 2 * tm * tn2 * itemsize + 2 * tm * 128 * 4

    out = pl.pallas_call(
        _normalize_kernel,
        out_shape=jax.ShapeDtypeStruct((m_pad, vocab_pad), out_dtype),
        grid_spec=pltpu.PrefetchScalarGridSpec(
            num_scalar_prefetch=0,
            grid=grid2,
            in_specs=[
                pl.BlockSpec((tm, tn2), lambda i, j: (i, j)),
                pl.BlockSpec((tm, 1), lambda i, j: (i, 0)),
            ],
            out_specs=pl.BlockSpec((tm, tn2), lambda i, j: (i, j)),
        ),
        compiler_params=pltpu.CompilerParams(
            dimension_semantics=("parallel", "parallel"),
            vmem_limit_bytes=_vmem_limit_bytes(est2),
        ),
    )(logits, lse)

    if m_pad != M or vocab_pad != vocab:
        out = out[:M, :vocab]
    return out.reshape(batch, seq, vocab)


if __name__ == "__main__":
    # Small shapes consistent with the module.  vocab=250 (not a multiple of 128) with
    # tn=128 exercises both the multi-tile online log-softmax and the vocab-padding /
    # masked-bias path; M=16 exercises the multi-row-tile path.
    batch, seq, d_model, vocab = 2, 8, 32, 250

    key = jax.random.PRNGKey(0)
    kx, kw, kb = jax.random.split(key, 3)

    x = jax.random.normal(kx, (batch, seq, d_model), dtype=jnp.float32)
    # Synthetic nn.Linear(d_model, vocab) parameters: weight (vocab, d_model), bias (vocab,)
    weight = jax.random.normal(kw, (vocab, d_model), dtype=jnp.float32) * 0.05
    bias = jax.random.normal(kb, (vocab,), dtype=jnp.float32) * 0.01

    w_t, b2d, vocab_true = prepare_generator_params(weight, bias, tn=128)
    out = generator_forward(x, w_t, b2d, vocab_true, tm=256, tn=128)
    out = jax.block_until_ready(out)

    # Reference: same math with bf16-rounded matmul inputs and f32 accumulation.
    x_bf = x.astype(jnp.bfloat16).astype(jnp.float32)
    w_bf = weight.astype(jnp.bfloat16).astype(jnp.float32)
    ref_logits = jnp.einsum("bsd,vd->bsv", x_bf, w_bf,
                            precision=jax.lax.Precision.HIGHEST) + bias
    ref = jax.nn.log_softmax(ref_logits, axis=-1)

    assert out.shape == (batch, seq, vocab)
    assert jnp.allclose(out, ref, atol=2e-4, rtol=2e-4), "mismatch vs reference"

    print("KERNEL_OK")
</pallas_src>

<mosaic_0001>
module attributes {stable_mosaic.version = 11 : i64} {
  func.func @_logits_lse_kernel(%arg0: i32, %arg1: i32, %arg2: memref<8x32xf32, #tpu.memory_space<vmem>>, %arg3: memref<32x128xbf16, #tpu.memory_space<vmem>>, %arg4: memref<1x128xf32, #tpu.memory_space<vmem>>, %arg5: memref<8x128xf32, #tpu.memory_space<vmem>>, %arg6: memref<8x1xf32, #tpu.memory_space<vmem>>, %arg7: memref<8x1xf32, #tpu.memory_space<vmem>>, %arg8: memref<8x1xf32, #tpu.memory_space<vmem>>) attributes {dimension_semantics = [#tpu.dimension_semantics<parallel>, #tpu.dimension_semantics<arbitrary>], iteration_bounds = array<i64: 2, 2>, scalar_prefetch = 0 : i64, scratch_operands = 2 : i64, tpu.core_type = #tpu.core_type<tc>, window_params = [{transform_indices = @transform_0, window_bounds = array<i64: 8, 32>}, {transform_indices = @transform_1, window_bounds = array<i64: 32, 128>}, {transform_indices = @transform_2, window_bounds = array<i64: 1, 128>}, {transform_indices = @transform_3, window_bounds = array<i64: 8, 128>}, {transform_indices = @transform_4, window_bounds = array<i64: 8, 1>}]} {
    %c0_i32 = arith.constant 0 : i32
    %0 = arith.cmpi eq, %arg1, %c0_i32 : i32
    %1 = arith.extui %0 : i1 to i32
    %c0_i32_0 = arith.constant 0 : i32
    %2 = arith.cmpi ne, %1, %c0_i32_0 : i32
    scf.if %2 {
      %cst_19 = arith.constant 0xFF800000 : f32
      %30 = vector.broadcast %cst_19 : f32 to vector<8x1xf32>
      %c0_20 = arith.constant 0 : index
      %c0_21 = arith.constant 0 : index
      %31 = vector.load %arg7[%c0_20, %c0_21] : memref<8x1xf32, #tpu.memory_space<vmem>>, vector<8x1xf32>
      tpu.vector_store %arg7[%c0_20, %c0_21], %30 {strides = array<i32>} : memref<8x1xf32, #tpu.memory_space<vmem>>, vector<8x1xf32>,
      %cst_22 = arith.constant 0.000000e+00 : f32
      %32 = vector.broadcast %cst_22 : f32 to vector<8x1xf32>
      %c0_23 = arith.constant 0 : index
      %c0_24 = arith.constant 0 : index
      %33 = vector.load %arg8[%c0_23, %c0_24] : memref<8x1xf32, #tpu.memory_space<vmem>>, vector<8x1xf32>
      tpu.vector_store %arg8[%c0_23, %c0_24], %32 {strides = array<i32>} : memref<8x1xf32, #tpu.memory_space<vmem>>, vector<8x1xf32>,
    } else {
    }
    %c0 = arith.constant 0 : index
    %c0_1 = arith.constant 0 : index
    %3 = vector.load %arg2[%c0, %c0_1] : memref<8x32xf32, #tpu.memory_space<vmem>>, vector<8x32xf32>
    %4 = arith.truncf %3 : vector<8x32xf32> to vector<8x32xbf16>
    %c0_2 = arith.constant 0 : index
    %c0_3 = arith.constant 0 : index
    %5 = vector.load %arg3[%c0_2, %c0_3] : memref<32x128xbf16, #tpu.memory_space<vmem>>, vector<32x128xbf16>
    %cst = arith.constant dense<0.000000e+00> : vector<8x128xf32>
    %6 = tpu.matmul %4, %5, %cst {dimension_numbers = #tpu.dot_dimension_numbers<[1], [0], [0], [1], [0, 0, 1, 1], [], []>} : vector<8x32xbf16>, vector<32x128xbf16>, vector<8x128xf32> -> vector<8x128xf32>
    %c0_4 = arith.constant 0 : index
    %c0_5 = arith.constant 0 : index
    %7 = vector.load %arg4[%c0_4, %c0_5] : memref<1x128xf32, #tpu.memory_space<vmem>>, vector<1x128xf32>
    %8 = vector.broadcast %7 : vector<1x128xf32> to vector<8x128xf32>
    %9 = arith.addf %6, %8 : vector<8x128xf32>
    %c0_6 = arith.constant 0 : index
    %c0_7 = arith.constant 0 : index
    %10 = vector.load %arg5[%c0_6, %c0_7] : memref<8x128xf32, #tpu.memory_space<vmem>>, vector<8x128xf32>
    tpu.vector_store %arg5[%c0_6, %c0_7], %9 {strides = array<i32>} : memref<8x128xf32, #tpu.memory_space<vmem>>, vector<8x128xf32>,
    %c0_8 = arith.constant 0 : index
    %c0_9 = arith.constant 0 : index
    %11 = vector.load %arg7[%c0_8, %c0_9] : memref<8x1xf32, #tpu.memory_space<vmem>>, vector<8x1xf32>
    %cst_10 = arith.constant dense<0xFF800000> : vector<8xf32>
    %12 = vector.multi_reduction <maximumf>, %9, %cst_10 [1] : vector<8x128xf32> to vector<8xf32>
    %13 = vector.shape_cast %12 : vector<8xf32> to vector<8x1xf32>
    %14 = arith.maximumf %11, %13 : vector<8x1xf32>
    %c0_11 = arith.constant 0 : index
    %c0_12 = arith.constant 0 : index
    %15 = vector.load %arg8[%c0_11, %c0_12] : memref<8x1xf32, #tpu.memory_space<vmem>>, vector<8x1xf32>
    %16 = arith.subf %11, %14 : vector<8x1xf32>
    %17 = math.exp %16 : vector<8x1xf32>
    %18 = arith.mulf %15, %17 : vector<8x1xf32>
    %19 = vector.broadcast %14 : vector<8x1xf32> to vector<8x128xf32>
    %20 = arith.subf %9, %19 : vector<8x128xf32>
    %21 = math.exp %20 : vector<8x128xf32>
    %cst_13 = arith.constant dense<0.000000e+00> : vector<8xf32>
    %22 = vector.multi_reduction <add>, %21, %cst_13 [1] : vector<8x128xf32> to vector<8xf32>
    %23 = vector.shape_cast %22 : vector<8xf32> to vector<8x1xf32>
    %24 = arith.addf %18, %23 : vector<8x1xf32>
    %c0_14 = arith.constant 0 : index
    %c0_15 = arith.constant 0 : index
    %25 = vector.load %arg8[%c0_14, %c0_15] : memref<8x1xf32, #tpu.memory_space<vmem>>, vector<8x1xf32>
    tpu.vector_store %arg8[%c0_14, %c0_15], %24 {strides = array<i32>} : memref<8x1xf32, #tpu.memory_space<vmem>>, vector<8x1xf32>,
    %c0_16 = arith.constant 0 : index
    %c0_17 = arith.constant 0 : index
    %26 = vector.load %arg7[%c0_16, %c0_17] : memref<8x1xf32, #tpu.memory_space<vmem>>, vector<8x1xf32>
    tpu.vector_store %arg7[%c0_16, %c0_17], %14 {strides = array<i32>} : memref<8x1xf32, #tpu.memory_space<vmem>>, vector<8x1xf32>,
    %c1_i32 = arith.constant 1 : i32
    %27 = arith.cmpi eq, %arg1, %c1_i32 : i32
    %28 = arith.extui %27 : i1 to i32
    %c0_i32_18 = arith.constant 0 : i32
    %29 = arith.cmpi ne, %28, %c0_i32_18 : i32
    scf.if %29 {
      %c0_19 = arith.constant 0 : index
      %c0_20 = arith.constant 0 : index
      %30 = vector.load %arg7[%c0_19, %c0_20] : memref<8x1xf32, #tpu.memory_space<vmem>>, vector<8x1xf32>
      %c0_21 = arith.constant 0 : index
      %c0_22 = arith.constant 0 : index
      %31 = vector.load %arg8[%c0_21, %c0_22] : memref<8x1xf32, #tpu.memory_space<vmem>>, vector<8x1xf32>
      %32 = math.log %31 : vector<8x1xf32>
      %33 = arith.addf %30, %32 : vector<8x1xf32>
      %c0_23 = arith.constant 0 : index
      %c0_24 = arith.constant 0 : index
      %34 = vector.load %arg6[%c0_23, %c0_24] : memref<8x1xf32, #tpu.memory_space<vmem>>, vector<8x1xf32>
      tpu.vector_store %arg6[%c0_23, %c0_24], %33 {strides = array<i32>} : memref<8x1xf32, #tpu.memory_space<vmem>>, vector<8x1xf32>,
    } else {
    }
    return
  }
  func.func @transform_0(%arg0: i32, %arg1: i32) -> (i32, i32) {
    %c0_i32 = arith.constant 0 : i32
    %c0_i32_0 = arith.constant 0 : i32
    return %arg0, %c0_i32 : i32, i32
  }
  func.func @transform_1(%arg0: i32, %arg1: i32) -> (i32, i32) {
    %c0_i32 = arith.constant 0 : i32
    %c0_i32_0 = arith.constant 0 : i32
    return %c0_i32, %arg1 : i32, i32
  }
  func.func @transform_2(%arg0: i32, %arg1: i32) -> (i32, i32) {
    %c0_i32 = arith.constant 0 : i32
    %c0_i32_0 = arith.constant 0 : i32
    return %c0_i32, %arg1 : i32, i32
  }
  func.func @transform_3(%arg0: i32, %arg1: i32) -> (i32, i32) {
    %c0_i32 = arith.constant 0 : i32
    return %arg0, %arg1 : i32, i32
  }
  func.func @transform_4(%arg0: i32, %arg1: i32) -> (i32, i32) {
    %c0_i32 = arith.constant 0 : i32
    %c0_i32_0 = arith.constant 0 : i32
    return %arg0, %c0_i32 : i32, i32
  }
}

</mosaic_0001>

<llo_original>
// kernel: tpu_custom_call.1
$region0: #{tpu_custom_call.1}
  #allocation0 [shape = 'u32[]', space=smem, size = 0x4, offset = 0x4, fixed_abs, tag = 'smem constant byte address 0x4 - core index']
  #allocation1 [shape = 'u32[144,128]{1,0:T(1,128)}', space=vmem, size = 0x12000, scoped, tag = 'internal scratch']
  #allocation2 [shape = 'f32[8,1]{1,0:T(8,128)}', space=vmem, size = 0x1000, scoped, tag = 'scratch operand']
  #allocation3 [shape = 'f32[8,1]{1,0:T(8,128)}', space=vmem, size = 0x1000, scoped, tag = 'scratch operand']
  %s0 = inlined_call_operand.hbm [shape: f32[16,32], index: 0, kind: input, shape index: {}]
  %s1 = inlined_call_operand.hbm [shape: bf16[32,256], index: 1, kind: input, shape index: {}]
  %s2 = inlined_call_operand.vmem [shape: f32[1,256], index: 2, kind: input, shape index: {}]
  %s3 = inlined_call_operand.hbm [shape: f32[16,256], index: 3, kind: output, shape index: {0}]
  %s4 = inlined_call_operand.vmem [shape: f32[16,1], index: 4, kind: output, shape index: {1}]
  %5 = xla_tuple %s3, %s4
  %s6 = sld [smem:[#allocation0]]
  $region69: #{tpu_custom_call.1} parent=0
    _
  %s8 = ssub.s32 1, %s6
  %s9 = scalar_select 0, %s8, %s6
  $region1: #{tpu_custom_call.1} parent=0
    #allocation4 [shape = 'u8[8192]{0}', space=vmem, size = 0x2000, scoped, tag = 'input window, operand 0']
    #allocation5 [shape = 's32[2]{0}', space=sflag, size = 0x8, scoped, tag = 'scoped memory for tpu_custom_call.1']
    #allocation6 [shape = 's32[2]{0}', space=sflag, size = 0x8, scoped, tag = 'scoped memory for tpu_custom_call.1']
    #allocation7 [shape = 'u8[16384]{0}', space=vmem, size = 0x4000, scoped, tag = 'input window, operand 1']
    #allocation8 [shape = 's32[2]{0}', space=sflag, size = 0x8, scoped, tag = 'scoped memory for tpu_custom_call.1']
    #allocation9 [shape = 'u8[8192]{0}', space=vmem, size = 0x2000, scoped, tag = 'output window, operand 0']
    %10 = vsyncpa [#allocation5], 0
    %s11 = scalar_lea.sflag [#allocation5], 1
    %12 = vsyncpa %s11, 0
    %13 = vsyncpa [#allocation8], 0
    %s14 = scalar_lea.sflag [#allocation8], 1
    %15 = vsyncpa %s14, 0
    %16 = vsyncpa [#allocation6], 0
    %s17 = scalar_lea.sflag [#allocation6], 1
    %18 = vsyncpa %s17, 0
    loop: start=0, step=1, limit=6
    $region2: #{tpu_custom_call.1} parent=1 // loop_pre_header
      _
    $region3: #{tpu_custom_call.1} parent=1 // loop_header
      %s20 = sphi 0, %s24
      %p21 = scmp.ge.s32.totalorder %s20, 6
      %s27 = sphi 0, %s39
      %s28 = sphi 0, %s35
      %s29 = sphi 0, %s27
      %s30 = sphi 0, %s28
      %s31 = sphi 0, %s29
      %s32 = sphi 0, %s30
      %s42 = sphi 0, %s44
      %s45 = sphi 0, %s42
      %s46 = sphi 0, %s45
      %s62 = sphi 0, %s46
      %s68 = sphi 0, %s70
      %s71 = sphi 0, %s68
      %s72 = sphi 0, %s71
      %s88 = sphi 0, %s72
      %s94 = sphi 0, %s96
      %s97 = sphi 0, %s94
      %s98 = sphi 0, %s97
      %s114 = sphi 0, %s98
      %s122 = sphi 0, %s124
      %s125 = sphi 0, %s122
      %s126 = sphi 0, %s125
      %s142 = sphi 0, %s126
      %s148 = sphi 0, %s150
      %s151 = sphi 0, %s148
      %s152 = sphi 0, %s151
      %s168 = sphi 0, %s152
    $region4: #{tpu_custom_call.1} parent=1 // loop_header_branch
      %23 = sbr.rel (%p21) target = $region8
    $region5: #{tpu_custom_call.1} parent=1 // loop_body
      %s25 = ssub.s32 %s20, 1
      %s26 = ssub.s32 %s20, 2
      %s33 = sadd.s32 1, %s28
      %p34 = scmp.ge.s32.totalorder %s33, 2
      %s35 = scalar_select %p34, 0, %s33
      %s36 = sadd.s32 1, %s27
      %s37 = scalar_select %p34, %s36, %s27
      %p38 = scmp.ge.s32.totalorder %s37, 2
      %s39 = scalar_select %p38, 0, %s37
      %s40 = ssub.s32 %s27, %s39
      %p41 = scmp.eq.s32.totalorder %s40, 0
      %s43 = sadd.s32 %s42, 1
      %s44 = scalar_select %p41, %s42, %s43
      %p47 = pneg %p41
      %p48 = scmp.eq.s32.totalorder %s20, 3
      %p49 = por %p47, %p48
      %p50 = scmp.ne.s32.totalorder %s42, %s45
      %p51 = scmp.eq.s32.totalorder %s20, 0
      %p52 = por %p50, %p51
      %p53 = scmp.ne.s32.totalorder %s42, %s45
      %p54 = scmp.eq.s32.totalorder %s25, 3
      %p55 = por %p53, %p54
      %p56 = scmp.ne.s32.totalorder %s45, %s46
      %p57 = scmp.eq.s32.totalorder %s25, 0
      %p58 = por %p56, %p57
      %p59 = scmp.ne.s32.totalorder %s45, %s46
      %p60 = scmp.eq.s32.totalorder %s26, 3
      %p61 = por %p59, %p60
      %p63 = scmp.ne.s32.totalorder %s46, %s62
      %p64 = scmp.eq.s32.totalorder %s26, 0
      %p65 = por %p63, %p64
      %s66 = ssub.s32 %s28, %s35
      %p67 = scmp.eq.s32.totalorder %s66, 0
      %s69 = sadd.s32 %s68, 1
      %s70 = scalar_select %p67, %s68, %s69
      %p73 = pneg %p67
      %p74 = scmp.eq.s32.totalorder %s20, 3
      %p75 = por %p73, %p74
      %p76 = scmp.ne.s32.totalorder %s68, %s71
      %p77 = scmp.eq.s32.totalorder %s20, 0
      %p78 = por %p76, %p77
      %p79 = scmp.ne.s32.totalorder %s68, %s71
      %p80 = scmp.eq.s32.totalorder %s25, 3
      %p81 = por %p79, %p80
      %p82 = scmp.ne.s32.totalorder %s71, %s72
      %p83 = scmp.eq.s32.totalorder %s25, 0
      %p84 = por %p82, %p83
      %p85 = scmp.ne.s32.totalorder %s71, %s72
      %p86 = scmp.eq.s32.totalorder %s26, 3
      %p87 = por %p85, %p86
      %p89 = scmp.ne.s32.totalorder %s72, %s88
      %p90 = scmp.eq.s32.totalorder %s26, 0
      %p91 = por %p89, %p90
      %s92 = ssub.s32 %s28, %s35
      %p93 = scmp.eq.s32.totalorder %s92, 0
      %s95 = sadd.s32 %s94, 1
      %s96 = scalar_select %p93, %s94, %s95
      %p99 = pneg %p93
      %p100 = scmp.eq.s32.totalorder %s20, 3
      %p101 = por %p99, %p100
      %p102 = scmp.ne.s32.totalorder %s94, %s97
      %p103 = scmp.eq.s32.totalorder %s20, 0
      %p104 = por %p102, %p103
      %p105 = scmp.ne.s32.totalorder %s94, %s97
      %p106 = scmp.eq.s32.totalorder %s25, 3
      %p107 = por %p105, %p106
      %p108 = scmp.ne.s32.totalorder %s97, %s98
      %p109 = scmp.eq.s32.totalorder %s25, 0
      %p110 = por %p108, %p109
      %p111 = scmp.ne.s32.totalorder %s97, %s98
      %p112 = scmp.eq.s32.totalorder %s26, 3
      %p113 = por %p111, %p112
      %p115 = scmp.ne.s32.totalorder %s98, %s114
      %p116 = scmp.eq.s32.totalorder %s26, 0
      %p117 = por %p115, %p116
      %s118 = ssub.s32 %s27, %s39
      %s119 = ssub.s32 %s28, %s35
      %s120 = sor.u32 %s118, %s119
      %p121 = scmp.eq.s32.totalorder %s120, 0
      %s123 = sadd.s32 %s122, 1
      %s124 = scalar_select %p121, %s122, %s123
      %p127 = pneg %p121
      %p128 = scmp.eq.s32.totalorder %s20, 3
      %p129 = por %p127, %p128
      %p130 = scmp.ne.s32.totalorder %s122, %s125
      %p131 = scmp.eq.s32.totalorder %s20, 0
      %p132 = por %p130, %p131
      %p133 = scmp.ne.s32.totalorder %s122, %s125
      %p134 = scmp.eq.s32.totalorder %s25, 3
      %p135 = por %p133, %p134
      %p136 = scmp.ne.s32.totalorder %s125, %s126
      %p137 = scmp.eq.s32.totalorder %s25, 0
      %p138 = por %p136, %p137
      %p139 = scmp.ne.s32.totalorder %s125, %s126
      %p140 = scmp.eq.s32.totalorder %s26, 3
      %p141 = por %p139, %p140
      %p143 = scmp.ne.s32.totalorder %s126, %s142
      %p144 = scmp.eq.s32.totalorder %s26, 0
      %p145 = por %p143, %p144
      %s146 = ssub.s32 %s27, %s39
      %p147 = scmp.eq.s32.totalorder %s146, 0
      %s149 = sadd.s32 %s148, 1
      %s150 = scalar_select %p147, %s148, %s149
      %p153 = pneg %p147
      %p154 = scmp.eq.s32.totalorder %s20, 3
      %p155 = por %p153, %p154
      %p156 = scmp.ne.s32.totalorder %s148, %s151
      %p157 = scmp.eq.s32.totalorder %s20, 0
      %p158 = por %p156, %p157
      %p159 = scmp.ne.s32.totalorder %s148, %s151
      %p160 = scmp.eq.s32.totalorder %s25, 3
      %p161 = por %p159, %p160
      %p162 = scmp.ne.s32.totalorder %s151, %s152
      %p163 = scmp.eq.s32.totalorder %s25, 0
      %p164 = por %p162, %p163
      %p165 = scmp.ne.s32.totalorder %s151, %s152
      %p166 = scmp.eq.s32.totalorder %s26, 3
      %p167 = por %p165, %p166
      %p169 = scmp.ne.s32.totalorder %s152, %s168
      %p170 = scmp.eq.s32.totalorder %s26, 0
      %p171 = por %p169, %p170
      %p172 = scmp.le.s32.totalorder 1, %s20
      %p173 = scmp.lt.s32.totalorder %s20, 5
      %p174 = pnand %p172, %p173
      %p175 = pneg %p174
      // Predicated region
      $region9: #{tpu_custom_call.1} parent=5 // pred_check
        _
      $region10: #{tpu_custom_call.1} parent=5 // pred_check_branch
        %177 = sbr.rel (%p174) target = $region12
      $region11: #{tpu_custom_call.1} parent=5 // pred_region
        %s178 = ssub.s32 %s20, 1
      $region12: #{tpu_custom_call.1} parent=5 // pred_fallthru
        _
      %p179 = scmp.lt.s32.totalorder %s20, 4
      // Predicated region
      $region13: #{tpu_custom_call.1} parent=5 // pred_check
        %p180 = pneg %p179
      $region14: #{tpu_custom_call.1} parent=5 // pred_check_branch
        %182 = sbr.rel (%p180) target = $region16
      $region15: #{tpu_custom_call.1} parent=5 // pred_region
        // Predicated region
        $region17: #{tpu_custom_call.1} parent=15 // pred_check
          %p183 = pneg %p52
        $region18: #{tpu_custom_call.1} parent=15 // pred_check_branch
          %185 = sbr.rel (%p183) target = $region20
        $region19: #{tpu_custom_call.1} parent=15 // pred_region
          %s186 = sand.u32 %s42, 1
          %s187 = scalar_lea.sflag [#allocation5], %s186
          %s188 = sand.u32 %s42, 1
          %s189 = smul.addr %s188, 8
          %s190 = scalar_lea.vmem [#allocation4], %s189
          %s192 = ssub.s32 128, 128
          %193 = vsyncadd %s187, %s192
          %s194 = smul.addr %s27, 128
          %s195 = scalar_lea.hbm %s0, %s194
          %s197 = sshll.u32 %s190, 4
          %s198 = int_to_ptr.vmem [resolvable:$true] %s197
          %200 = dma.hbm_to_vmem [thread:$0]  %s195, 128, %s198, %s187
        $region20: #{tpu_custom_call.1} parent=15 // pred_fallthru
          _
        // Predicated region
        $region21: #{tpu_custom_call.1} parent=15 // pred_check
          %p201 = pneg %p78
        $region22: #{tpu_custom_call.1} parent=15 // pred_check_branch
          %203 = sbr.rel (%p201) target = $region24
        $region23: #{tpu_custom_call.1} parent=15 // pred_region
          %s204 = sand.u32 %s68, 1
          %s205 = scalar_lea.sflag [#allocation8], %s204
          %s206 = sand.u32 %s68, 1
          %s207 = smul.addr %s206, 16
          %s208 = scalar_lea.vmem [#allocation7], %s207
          %s210 = ssub.s32 256, 256
          %211 = vsyncadd %s205, %s210
          %s212 = smul.addr %s28, 64
          %s213 = scalar_lea.hbm %s1, %s212
          %s214 = sshll.u32 %s208, 4
          %s215 = int_to_ptr.vmem [resolvable:$true] %s214
          %220 = dma.hbm_to_vmem [thread:$0]  %s213, 256, %s215, %s205, 128, 64, 4
        $region24: #{tpu_custom_call.1} parent=15 // pred_fallthru
          _
        // Predicated region
        $region25: #{tpu_custom_call.1} parent=15 // pred_check
          %p221 = pneg %p104
        $region26: #{tpu_custom_call.1} parent=15 // pred_check_branch
          %223 = sbr.rel (%p221) target = $region28
        $region27: #{tpu_custom_call.1} parent=15 // pred_region
          %p224 = scmp.lt.s32.totalorder %s28, 1
          %s225 = scalar_select %p224, %s28, 1
          %s226 = scalar_lea.vmem %s2, %s225
        $region28: #{tpu_custom_call.1} parent=15 // pred_fallthru
          _
      $region16: #{tpu_custom_call.1} parent=5 // pred_fallthru
        _
      %p227 = scmp.le.s32.totalorder 1, %s20
      %p228 = scmp.lt.s32.totalorder %s20, 5
      %p229 = pnand %p227, %p228
      %p230 = pneg %p229
      // Predicated region
      $region29: #{tpu_custom_call.1} parent=5 // pred_check
        _
      $region30: #{tpu_custom_call.1} parent=5 // pred_check_branch
        %232 = sbr.rel (%p229) target = $region32
      $region31: #{tpu_custom_call.1} parent=5 // pred_region
        %s233 = ssub.s32 %s20, 1
        %s234 = sand.u32 %s45, 1
        %s235 = scalar_lea.sflag [#allocation5], %s234
        %s236 = sand.u32 %s45, 1
        %s237 = smul.addr %s236, 8
        %s238 = scalar_lea.vmem [#allocation4], %s237
        // Predicated region
        $region33: #{tpu_custom_call.1} parent=31 // pred_check
          %p239 = pneg %p58
        $region34: #{tpu_custom_call.1} parent=31 // pred_check_branch
          %241 = sbr.rel (%p239) target = $region36
        $region35: #{tpu_custom_call.1} parent=31 // pred_region
          %242 = dma.done %s235, 128
        $region36: #{tpu_custom_call.1} parent=31 // pred_fallthru
          _
        %s243 = sand.u32 %s71, 1
        %s244 = scalar_lea.sflag [#allocation8], %s243
        %s245 = sand.u32 %s71, 1
        %s246 = smul.addr %s245, 16
        %s247 = scalar_lea.vmem [#allocation7], %s246
        // Predicated region
        $region37: #{tpu_custom_call.1} parent=31 // pred_check
          %p248 = pneg %p84
        $region38: #{tpu_custom_call.1} parent=31 // pred_check_branch
          %250 = sbr.rel (%p248) target = $region40
        $region39: #{tpu_custom_call.1} parent=31 // pred_region
          %251 = dma.done %s244, 256
        $region40: #{tpu_custom_call.1} parent=31 // pred_fallthru
          _
        %s252 = sand.u32 %s45, 1
        %s253 = scalar_lea.sflag [#allocation5], %s252
        %s254 = sand.u32 %s45, 1
        %s255 = smul.addr %s254, 8
        %s256 = scalar_lea.vmem [#allocation4], %s255
        %p257 = pneg %p58
        %p258 = pneg %p55
        %s259 = sand.u32 %s71, 1
        %s260 = scalar_lea.sflag [#allocation8], %s259
        %s261 = sand.u32 %s71, 1
        %s262 = smul.addr %s261, 16
        %s263 = scalar_lea.vmem [#allocation7], %s262
        %p264 = pneg %p84
        %p265 = pneg %p81
        %p266 = scmp.lt.s32.totalorder %s30, 1
        %s267 = scalar_select %p266, %s30, 1
        %s268 = scalar_lea.vmem %s2, %s267
        %p269 = pneg %p110
        %p270 = pneg %p107
        %p271 = pneg %p138
        %p272 = pneg %p135
        %s273 = sand.u32 %s125, 1
        %s274 = scalar_lea.sflag [#allocation6], %s273
        %s275 = sand.u32 %s125, 1
        %s276 = smul.addr %s275, 8
        %s277 = scalar_lea.vmem [#allocation9], %s276
        %p278 = pneg %p164
        %p279 = pneg %p161
        %p280 = scmp.lt.s32.totalorder %s29, 1
        %s281 = scalar_select %p280, %s29, 1
        %s282 = smul.addr %s281, 8
        %s283 = scalar_lea.vmem %s4, %s282
        %p284 = scmp.lt.s32.totalorder %s30, 1
        %s285 = scalar_select %p284, %s30, 1
        %s286 = scalar_lea.vmem %s2, %s285
        %p287 = scmp.lt.s32.totalorder %s29, 1
        %s288 = scalar_select %p287, %s29, 1
        %s289 = smul.addr %s288, 8
        %s290 = scalar_lea.vmem %s4, %s289
        %p292 = scmp.eq.s32.totalorder %s30, 0
        // Predicated region
        $region41: #{tpu_custom_call.1} parent=31 // pred_check
          %p293 = pneg %p292
        $region42: #{tpu_custom_call.1} parent=31 // pred_check_branch
          %295 = sbr.rel (%p293) target = $region44
        $region43: #{tpu_custom_call.1} parent=31 // pred_region
          %vm296 = vcmask 7168
          %297 = vst.msk [vmem:[#allocation2] sm:$0xff] %vm296, -inf
          %298 = vst.msk [vmem:[#allocation3] sm:$0xff] %vm296, 0.0
        $region44: #{tpu_custom_call.1} parent=31 // pred_fallthru
          _
        %v299 = vld [vmem:[%s238] sm:$0xff]
        %v300 = vpack.c.bf16 %v299, %v299
        %v301 = vld [vmem:[%s247] sm:$0xf]
        %v302 = vld [vmem:[%s247 + $0x4] sm:$0xf]
        %v303 = vld [vmem:[%s247 + $0x8] sm:$0xf]
        %v304 = vld [vmem:[%s247 + $0xc] sm:$0xf]
        %v305 = vld [vmem:[%s286] sm:$0x1]
        %v307 = vlaneseq
        %v308 = vshrl.u32 %v307, 7
        %v309 = vsub.s32 0, %v308
        %v310 = vrot.slane %v305, %v309
        %v316 = vunpack.c.l.b16 %v301
        %v317 = vunpack.c.l.b16 %v302
        %v318 = vunpack.c.l.b16 %v303
        %v319 = vunpack.c.l.b16 %v304
        %v320 = vpack.c.b16 %v317, %v316
        %v321 = vpack.c.b16 %v319, %v318
        %vm324 = vcmask 261120
        %v326 = vsel %vm324, %v300, 0
        %328 = vmatprep.subr.bf16.mxu0 0
        %329 = vmatpush1.bf16.msra.mxu0 %v320
        %330 = vmatprep.subr.bf16.mxu0 0
        %331 = vmatpush1.bf16.msra.mxu0 %v321
        %332 = vmatprep.subr.bf16.mxu0 0
        %333 = vmatpush1.bf16.msra.mxu0 0
        %334 = vmatprep.subr.bf16.mxu0 0
        %335 = vmatpush1.bf16.msra.mxu0 0
        %336 = vmatprep.subr.bf16.mxu0 0
        %337 = vmatpush1.bf16.msra.mxu0 0
        %338 = vmatprep.subr.bf16.mxu0 0
        %339 = vmatpush1.bf16.msra.mxu0 0
        %340 = vmatprep.subr.bf16.mxu0 0
        %341 = vmatpush1.bf16.msra.mxu0 0
        %342 = vmatprep.subr.bf16.mxu0 0
        %343 = vmatpush1.bf16.msra.mxu0 0
        %344 = vmatprep.subr.bf16.mxu0 0
        %345 = vmatpush1.bf16.msra.mxu0 0
        %346 = vmatprep.subr.bf16.mxu0 0
        %347 = vmatpush1.bf16.msra.mxu0 0
        %348 = vmatprep.subr.bf16.mxu0 0
        %349 = vmatpush1.bf16.msra.mxu0 0
        %350 = vmatprep.subr.bf16.mxu0 0
        %351 = vmatpush1.bf16.msra.mxu0 0
        %352 = vmatprep.subr.bf16.mxu0 0
        %353 = vmatpush1.bf16.msra.mxu0 0
        %354 = vmatprep.subr.bf16.mxu0 0
        %355 = vmatpush1.bf16.msra.mxu0 0
        %356 = vmatprep.subr.bf16.mxu0 0
        %357 = vmatpush1.bf16.msra.mxu0 0
        %358 = vmatprep.subr.bf16.mxu0 0
        %359 = vmatpush1.bf16.msra.mxu0 0
        %360 = vmatprep.mubr.bf16.mxu0 0
        %361 = vmatmul.mubr.bf16.gmra.mrb[0].mxu0 %v326
        %v362 = vpop.f32.mrb[0].mxu0
        %v363 = vadd.f32 %v310, %v362
        %v364 = vpop.f32.mrb[0].mxu0
        %v365 = vpop.f32.mrb[0].mxu0
        %v366 = vpop.f32.mrb[0].mxu0
        %367 = vdwg.mxu0
        %368 = vst [vmem:[%s277] sm:$0xff] %v363
        %v369 = vld [vmem:[#allocation2] sm:$0xff]
        %370 = vmax.xlane.f32.xlu0 %v363
        %v371 = vpop.xlane.xlu0 %370
        %v372 = vmax.f32 %v369, %v371
        %v373 = vld [vmem:[#allocation3] sm:$0xff]
        %v374 = vsub.f32 %v369, %v372
        %v375 = vmul.f32 %v374, 1.442695
        %v376 = vpow.pop %v375
        %v377 = vmul.f32 %v373, %v376
        %379 = vset.pattern.permute.xlu0 0
        %380 = vperm.xlu0 %379, %v372
        %v381 = vpop.permute.xlu0 %380
        %v383 = vsub.f32 %v363, %v381
        %v384 = vmul.f32 %v383, 1.442695
        %v385 = vpow.pop %v384
        %386 = vadd.xlane.f32.xlu0 %v385
        %v387 = vpop.xlane.xlu0 %386
        %v388 = vadd.f32 %v377, %v387
        %vm389 = vcmask 7168
        %390 = vst.msk [vmem:[#allocation3] sm:$0xff] %vm389, %v388
        %391 = vst.msk [vmem:[#allocation2] sm:$0xff] %vm389, %v372
        %p392 = scmp.eq.s32.totalorder %s30, 1
        // Predicated region
        $region45: #{tpu_custom_call.1} parent=31 // pred_check
          %p393 = pneg %p392
        $region46: #{tpu_custom_call.1} parent=31 // pred_check_branch
          %395 = sbr.rel (%p393) target = $region48
        $region47: #{tpu_custom_call.1} parent=31 // pred_region
          %v396 = vld [vmem:[#allocation2] sm:$0xff]
          %v397 = vld [vmem:[#allocation3] sm:$0xff]
          %v398 = vlog2.pop %v397
          %v399 = vmul.f32 %v398, 0.6931472
          %v400 = vadd.f32 %v396, %v399
          %401 = vst.msk [vmem:[%s290] sm:$0xff] %vm389, %v400
        $region48: #{tpu_custom_call.1} parent=31 // pred_fallthru
          _
        %s402 = sand.u32 %s125, 1
        %s403 = scalar_lea.sflag [#allocation6], %s402
        %s404 = sand.u32 %s125, 1
        %s405 = smul.addr %s404, 8
        %s406 = scalar_lea.vmem [#allocation9], %s405
        %p407 = scmp.lt.s32.totalorder %s29, 1
        %s408 = scalar_select %p407, %s29, 1
        %s409 = smul.addr %s408, 8
        %s410 = scalar_lea.vmem %s4, %s409
        // Predicated region
        $region49: #{tpu_custom_call.1} parent=31 // pred_check
          %p411 = pneg %p135
        $region50: #{tpu_custom_call.1} parent=31 // pred_check_branch
          %413 = sbr.rel (%p411) target = $region52
        $region51: #{tpu_custom_call.1} parent=31 // pred_region
          %s415 = ssub.s32 128, 128
          %416 = vsyncadd %s403, %s415
          %s417 = smul.addr %s29, 2
          %s418 = sadd.s32 %s30, %s417
          %s419 = smul.addr %s418, 128
          %s420 = scalar_lea.hbm %s3, %s419
          %s422 = sshll.u32 %s406, 4
          %s423 = int_to_ptr.vmem [resolvable:$true] %s422
          %425 = dma.vmem_to_hbm [thread:$0]  %s423, 128, %s420, %s403
        $region52: #{tpu_custom_call.1} parent=31 // pred_fallthru
          _
        // Predicated region
        $region53: #{tpu_custom_call.1} parent=31 // pred_check
          %p426 = pneg %p161
        $region54: #{tpu_custom_call.1} parent=31 // pred_check_branch
          %428 = sbr.rel (%p426) target = $region56
        $region55: #{tpu_custom_call.1} parent=31 // pred_region
          _
        $region56: #{tpu_custom_call.1} parent=31 // pred_fallthru
          _
      $region32: #{tpu_custom_call.1} parent=5 // pred_fallthru
        _
      %p429 = scmp.le.s32.totalorder 2, %s20
      // Predicated region
      $region57: #{tpu_custom_call.1} parent=5 // pred_check
        %p430 = pneg %p429
      $region58: #{tpu_custom_call.1} parent=5 // pred_check_branch
        %432 = sbr.rel (%p430) target = $region60
      $region59: #{tpu_custom_call.1} parent=5 // pred_region
        %s433 = ssub.s32 %s20, 2
        // Predicated region
        $region61: #{tpu_custom_call.1} parent=59 // pred_check
          %p434 = pneg %p141
        $region62: #{tpu_custom_call.1} parent=59 // pred_check_branch
          %436 = sbr.rel (%p434) target = $region64
        $region63: #{tpu_custom_call.1} parent=59 // pred_region
          %s437 = sand.u32 %s126, 1
          %s438 = scalar_lea.sflag [#allocation6], %s437
          %s439 = sand.u32 %s126, 1
          %s440 = smul.addr %s439, 8
          %s441 = scalar_lea.vmem [#allocation9], %s440
          %442 = dma.done %s438, 128
        $region64: #{tpu_custom_call.1} parent=59 // pred_fallthru
          _
        // Predicated region
        $region65: #{tpu_custom_call.1} parent=59 // pred_check
          %p443 = pneg %p167
        $region66: #{tpu_custom_call.1} parent=59 // pred_check_branch
          %445 = sbr.rel (%p443) target = $region68
        $region67: #{tpu_custom_call.1} parent=59 // pred_region
          %p446 = scmp.lt.s32.totalorder %s31, 1
          %s447 = scalar_select %p446, %s31, 1
          %s448 = smul.addr %s447, 8
          %s449 = scalar_lea.vmem %s4, %s448
        $region68: #{tpu_custom_call.1} parent=59 // pred_fallthru
          _
      $region60: #{tpu_custom_call.1} parent=5 // pred_fallthru
        _
    $region6: #{tpu_custom_call.1} parent=1 // loop_footer
      %s24 = sadd.s32 1, %s20
    $region7: #{tpu_custom_call.1} parent=1 // loop_footer_branch
      %19 = sbr.rel target = $region3
    $region8: #{tpu_custom_call.1} parent=1 // loop_exit
      _
    %450 = vsyncpa [#allocation5], 1
    %s451 = scalar_lea.sflag [#allocation5], 1
    %452 = vsyncpa %s451, 1
    %453 = vsyncpa [#allocation8], 1
    %s454 = scalar_lea.sflag [#allocation8], 1
    %455 = vsyncpa %s454, 1
    %456 = vsyncpa [#allocation6], 1
    %s457 = scalar_lea.sflag [#allocation6], 1
    %458 = vsyncpa %s457, 1

</llo_original>
